<compile_context>
chip_gen: v5e
topology: v5e:2x2
jax: 0.10.0
libtpu: 0.0.40
codegen_flags: <defaults>
</compile_context>

<pallas_src>
import jax
import jax.numpy as jnp
from jax.experimental import pallas as pl
from jax.experimental.pallas import tpu as pltpu


def linear_kernel(wb_ref, x_ref, o_ref):
    # wb_ref: SMEM (2,) f32 holding [weight, bias]
    # x_ref / o_ref: VMEM (block_rows, LANES) f32 tiles
    w = wb_ref[0]
    b = wb_ref[1]
    # Pure VPU elementwise FMA; scalar broadcast happens in-register.
    o_ref[...] = x_ref[...] * w + b


def linear_forward(x, weight, bias, *, lanes=1024, max_block_rows=512):
    """x: (N, 1) f32, weight: (1, 1) f32, bias: (1,) f32 -> (N, 1) f32.

    Semantics identical to torch.nn.Linear(1, 1): y = x * w + b.
    """
    orig_shape = x.shape
    n = x.size

    flat = x.reshape(-1).astype(jnp.float32)

    # Lane-dense slab: pad N up so it reshapes to (rows_padded, lanes) with
    # rows_padded a multiple of the row-tile (and the row-tile a multiple of 8).
    rows = -(-n // lanes)                                   # cdiv(n, lanes)
    block_rows = min(max_block_rows, ((rows + 7) // 8) * 8)  # multiple of 8
    rows_padded = ((rows + block_rows - 1) // block_rows) * block_rows
    total_padded = rows_padded * lanes

    flat = jnp.pad(flat, (0, total_padded - n))
    slab = flat.reshape(rows_padded, lanes)

    # Two scalars in SMEM: [w, b].
    wb = jnp.stack(
        [weight.reshape(()).astype(jnp.float32),
         bias.reshape(()).astype(jnp.float32)]
    )

    grid = (rows_padded // block_rows,)

    out = pl.pallas_call(
        linear_kernel,
        out_shape=jax.ShapeDtypeStruct((rows_padded, lanes), jnp.float32),
        grid_spec=pltpu.PrefetchScalarGridSpec(
            num_scalar_prefetch=0,
            grid=grid,
            in_specs=[
                # Scalars live in SMEM, whole-array (no per-step VMEM DMA).
                pl.BlockSpec(memory_space=pltpu.MemorySpace.SMEM),
                # Lane-dense x tiles, auto double-buffered by BlockSpec.
                pl.BlockSpec((block_rows, lanes), lambda i: (i, 0)),
            ],
            out_specs=pl.BlockSpec((block_rows, lanes), lambda i: (i, 0)),
        ),
        compiler_params=pltpu.CompilerParams(
            # Row tiles are independent -> shard across TCs on v7x megacore.
            dimension_semantics=("parallel",),
        ),
        # Note: input_output_aliases={1: 0} was considered (optional review
        # item) but skipped: the padded slab is a fresh eager array, so XLA
        # would copy-protect it and the alias would not save HBM traffic.
    )(wb, slab)

    return out.reshape(-1)[:n].reshape(orig_shape)


if __name__ == "__main__":
    key = jax.random.PRNGKey(0)
    kx, kw, kb = jax.random.split(key, 3)

    # Small deterministic example: batch = 8, in/out features = 1
    # (matches torch.nn.Linear(1, 1) input convention).
    x = jax.random.normal(kx, (8, 1), dtype=jnp.float32)
    weight = jax.random.normal(kw, (1, 1), dtype=jnp.float32)  # (out, in)
    bias = jax.random.normal(kb, (1,), dtype=jnp.float32)

    y = linear_forward(x, weight, bias)
    jax.block_until_ready(y)

    # Reference check against plain JAX (same semantics as torch.nn.Linear).
    y_ref = x @ weight.T + bias
    assert y.shape == y_ref.shape, "shape mismatch vs reference"
    assert jnp.allclose(y, y_ref, atol=1e-5), "mismatch vs reference"

    print("KERNEL_OK")
</pallas_src>

<mosaic_0001>
module attributes {stable_mosaic.version = 11 : i64} {
  func.func @linear_kernel(%arg0: i32, %arg1: memref<2xf32, #tpu.memory_space<smem>>, %arg2: memref<8x1024xf32, #tpu.memory_space<vmem>>, %arg3: memref<8x1024xf32, #tpu.memory_space<vmem>>) attributes {dimension_semantics = [#tpu.dimension_semantics<parallel>], iteration_bounds = array<i64: 1>, scalar_prefetch = 0 : i64, scratch_operands = 0 : i64, tpu.core_type = #tpu.core_type<tc>, window_params = [{transform_indices = @transform_0, window_bounds = array<i64: 2>}, {transform_indices = @transform_1, window_bounds = array<i64: 8, 1024>}, {transform_indices = @transform_2, window_bounds = array<i64: 8, 1024>}]} {
    %c0 = arith.constant 0 : index
    %0 = memref.load %arg1[%c0] : memref<2xf32, #tpu.memory_space<smem>>
    %c1 = arith.constant 1 : index
    %1 = memref.load %arg1[%c1] : memref<2xf32, #tpu.memory_space<smem>>
    %c0_0 = arith.constant 0 : index
    %c0_1 = arith.constant 0 : index
    %2 = vector.load %arg2[%c0_0, %c0_1] : memref<8x1024xf32, #tpu.memory_space<vmem>>, vector<8x1024xf32>
    %3 = vector.broadcast %0 : f32 to vector<8x1024xf32>
    %4 = arith.mulf %2, %3 : vector<8x1024xf32>
    %5 = vector.broadcast %1 : f32 to vector<8x1024xf32>
    %6 = arith.addf %4, %5 : vector<8x1024xf32>
    %c0_2 = arith.constant 0 : index
    %c0_3 = arith.constant 0 : index
    %7 = vector.load %arg3[%c0_2, %c0_3] : memref<8x1024xf32, #tpu.memory_space<vmem>>, vector<8x1024xf32>
    tpu.vector_store %arg3[%c0_2, %c0_3], %6 {strides = array<i32>} : memref<8x1024xf32, #tpu.memory_space<vmem>>, vector<8x1024xf32>,
    return
  }
  func.func @transform_0(%arg0: i32) -> i32 {
    %c0_i32 = arith.constant 0 : i32
    %c0_i32_0 = arith.constant 0 : i32
    return %c0_i32 : i32
  }
  func.func @transform_1(%arg0: i32) -> (i32, i32) {
    %c0_i32 = arith.constant 0 : i32
    %c0_i32_0 = arith.constant 0 : i32
    return %arg0, %c0_i32 : i32, i32
  }
  func.func @transform_2(%arg0: i32) -> (i32, i32) {
    %c0_i32 = arith.constant 0 : i32
    %c0_i32_0 = arith.constant 0 : i32
    return %arg0, %c0_i32 : i32, i32
  }
}

</mosaic_0001>

<llo_original>
// kernel: tpu_custom_call.1
$region0: #{tpu_custom_call.1}
  #allocation0 [shape = 'u32[]', space=smem, size = 0x4, offset = 0x4, fixed_abs, tag = 'smem constant byte address 0x4 - core index']
  #allocation1 [shape = 'u32[72,128]{1,0:T(1,128)}', space=vmem, size = 0x9000, scoped, tag = 'internal scratch']
  %s0 = inlined_call_operand.hbm [shape: f32[2], index: 0, kind: input, shape index: {}]
  %s1 = inlined_call_operand.hbm [shape: f32[8,1024], index: 1, kind: input, shape index: {}]
  %s2 = inlined_call_operand.hbm [shape: f32[8,1024], index: 2, kind: output, shape index: {}]
  %s3 = sld [smem:[#allocation0]]
  $region26: #{tpu_custom_call.1} parent=0
    _
  %s5 = ssub.s32 1, %s3
  %s6 = scalar_select 0, %s5, %s3
  $region1: #{tpu_custom_call.1} parent=0
    #allocation2 [shape = 'u8[512]{0}', space=smem, size = 0x200, scoped, tag = 'input window, operand 0, single buffered']
    #allocation3 [shape = 's32[1]{0}', space=sflag, size = 0x4, scoped, tag = 'scoped memory for tpu_custom_call.1']
    #allocation4 [shape = 's32[1]{0}', space=sflag, size = 0x4, scoped, tag = 'scoped memory for tpu_custom_call.1']
    #allocation5 [shape = 's32[1]{0}', space=sflag, size = 0x4, scoped, tag = 'scoped memory for tpu_custom_call.1']
    #allocation6 [shape = 'u8[32768]{0}', space=vmem, size = 0x8000, scoped, tag = 'input window, operand 1, single buffered']
    #allocation7 [shape = 'u8[32768]{0}', space=vmem, size = 0x8000, scoped, tag = 'output window, operand 0, single buffered']
    %7 = vsyncpa [#allocation5], 0
    %8 = vsyncpa [#allocation3], 0
    %9 = vsyncpa [#allocation4], 0
    // Predicated region
    $region2: #{tpu_custom_call.1} parent=1 // pred_check
      _
    $region3: #{tpu_custom_call.1} parent=1 // pred_check_branch
      %11 = sbr.rel (0) target = $region5
    $region4: #{tpu_custom_call.1} parent=1 // pred_region
      %13 = vsyncadd [#allocation5], 0
      %s15 = sshll.u32 %s0, 4
      %s16 = int_to_ptr.hbm [resolvable:$true] %s15
      %18 = dma.hbm_to_smem %s16, 16, [#allocation2], [#allocation5]
    $region5: #{tpu_custom_call.1} parent=1 // pred_fallthru
      _
    // Predicated region
    $region6: #{tpu_custom_call.1} parent=1 // pred_check
      _
    $region7: #{tpu_custom_call.1} parent=1 // pred_check_branch
      %20 = sbr.rel (0) target = $region9
    $region8: #{tpu_custom_call.1} parent=1 // pred_region
      %22 = vsyncadd [#allocation3], 0
      %s24 = sshll.u32 %s1, 4
      %s25 = int_to_ptr.hbm [resolvable:$true] %s24
      %s26 = sshll.u32 [#allocation6], 4
      %s27 = int_to_ptr.vmem [resolvable:$true] %s26
      %29 = dma.hbm_to_vmem [thread:$0]  %s25, 1024, %s27, [#allocation3]
    $region9: #{tpu_custom_call.1} parent=1 // pred_fallthru
      _
    // Predicated region
    $region10: #{tpu_custom_call.1} parent=1 // pred_check
      _
    $region11: #{tpu_custom_call.1} parent=1 // pred_check_branch
      %31 = sbr.rel (0) target = $region13
    $region12: #{tpu_custom_call.1} parent=1 // pred_region
      %33 = dma.done [#allocation5], 16
    $region13: #{tpu_custom_call.1} parent=1 // pred_fallthru
      _
    // Predicated region
    $region14: #{tpu_custom_call.1} parent=1 // pred_check
      _
    $region15: #{tpu_custom_call.1} parent=1 // pred_check_branch
      %35 = sbr.rel (0) target = $region17
    $region16: #{tpu_custom_call.1} parent=1 // pred_region
      %37 = dma.done [#allocation3], 1024
    $region17: #{tpu_custom_call.1} parent=1 // pred_fallthru
      _
    %38 = sfence
    %s39 = sld [smem:[#allocation2]]
    %s40 = sld [smem:[#allocation2 + $0x1]]
    %v41 = vld [vmem:[#allocation6] sm:$0xff]
    %v42 = vld [vmem:[#allocation6 + $0x8] sm:$0xff]
    %v43 = vld [vmem:[#allocation6 + $0x10] sm:$0xff]
    %v44 = vld [vmem:[#allocation6 + $0x18] sm:$0xff]
    %v45 = vld [vmem:[#allocation6 + $0x20] sm:$0xff]
    %v46 = vld [vmem:[#allocation6 + $0x28] sm:$0xff]
    %v47 = vld [vmem:[#allocation6 + $0x30] sm:$0xff]
    %v48 = vld [vmem:[#allocation6 + $0x38] sm:$0xff]
    %v49 = vstv %s39
    %v50 = vmul.f32 %v41, %v49
    %v51 = vmul.f32 %v42, %v49
    %v52 = vmul.f32 %v43, %v49
    %v53 = vmul.f32 %v44, %v49
    %v54 = vmul.f32 %v45, %v49
    %v55 = vmul.f32 %v46, %v49
    %v56 = vmul.f32 %v47, %v49
    %v57 = vmul.f32 %v48, %v49
    %v58 = vstv %s40
    %v59 = vadd.f32 %v50, %v58
    %v60 = vadd.f32 %v51, %v58
    %v61 = vadd.f32 %v52, %v58
    %v62 = vadd.f32 %v53, %v58
    %v63 = vadd.f32 %v54, %v58
    %v64 = vadd.f32 %v55, %v58
    %v65 = vadd.f32 %v56, %v58
    %v66 = vadd.f32 %v57, %v58
    %67 = vst [vmem:[#allocation7] sm:$0xff] %v59
    %68 = vst [vmem:[#allocation7 + $0x8] sm:$0xff] %v60
    %69 = vst [vmem:[#allocation7 + $0x10] sm:$0xff] %v61
    %70 = vst [vmem:[#allocation7 + $0x18] sm:$0xff] %v62
    %71 = vst [vmem:[#allocation7 + $0x20] sm:$0xff] %v63
    %72 = vst [vmem:[#allocation7 + $0x28] sm:$0xff] %v64
    %73 = vst [vmem:[#allocation7 + $0x30] sm:$0xff] %v65
    %74 = vst [vmem:[#allocation7 + $0x38] sm:$0xff] %v66
    // Predicated region
    $region18: #{tpu_custom_call.1} parent=1 // pred_check
      _
    $region19: #{tpu_custom_call.1} parent=1 // pred_check_branch
      %76 = sbr.rel (0) target = $region21
    $region20: #{tpu_custom_call.1} parent=1 // pred_region
      %78 = vsyncadd [#allocation4], 0
      %s80 = sshll.u32 [#allocation7], 4
      %s81 = int_to_ptr.vmem [resolvable:$true] %s80
      %s82 = sshll.u32 %s2, 4
      %s83 = int_to_ptr.hbm [resolvable:$true] %s82
      %85 = dma.vmem_to_hbm [thread:$0]  %s81, 1024, %s83, [#allocation4]
    $region21: #{tpu_custom_call.1} parent=1 // pred_fallthru
      _
    // Predicated region
    $region22: #{tpu_custom_call.1} parent=1 // pred_check
      _
    $region23: #{tpu_custom_call.1} parent=1 // pred_check_branch
      %87 = sbr.rel (0) target = $region25
    $region24: #{tpu_custom_call.1} parent=1 // pred_region
      %89 = dma.done [#allocation4], 1024
    $region25: #{tpu_custom_call.1} parent=1 // pred_fallthru
      _
    %90 = vsyncpa [#allocation3], 1
    %91 = vsyncpa [#allocation4], 1
    %92 = vsyncpa [#allocation5], 1

</llo_original>
